<compile_context>
chip_gen: v6e
topology: v6e:2x2x1
jax: 0.10.0
libtpu: 0.0.40
codegen_flags: <defaults>
</compile_context>

<pallas_src>
import jax
import jax.numpy as jnp
from jax.experimental import pallas as pl
from jax.experimental.pallas import tpu as pltpu

IN_FEATURES = 28 * 28   # 784
HIDDEN = 256
OUT_FEATURES = 10


def mlp_kernel(x_ref, w1_ref, b1_ref, w2_ref, b2_ref, o_ref):
    # fc1: (TM, 784) @ (784, 256) -> f32 accum, +bias, ReLU.
    # MXU operands cast to bf16 in-kernel (VPU cast, no extra HBM traffic).
    x = x_ref[...].astype(jnp.bfloat16)
    w1 = w1_ref[...].astype(jnp.bfloat16)
    h = jnp.dot(x, w1, preferred_element_type=jnp.float32)
    h = jnp.maximum(h + b1_ref[...], 0.0)          # f32 elementwise (v5e-safe)
    # fc2: (TM, 256) @ (256, 10) -> f32 accum, +bias. Narrow lane-10 output.
    w2 = w2_ref[...].astype(jnp.bfloat16)
    out = jnp.dot(h.astype(jnp.bfloat16), w2, preferred_element_type=jnp.float32)
    o_ref[...] = (out + b2_ref[...]).astype(o_ref.dtype)


def _round_up(n, m):
    return ((n + m - 1) // m) * m


@jax.jit
def net_forward(x_nchw, w1, b1, w2, b2):
    """x_nchw: (B, 1, 28, 28) float32 -> logits (B, 10) float32.

    Weights stored (in_features, out_features): x @ W + b == PyTorch x @ W.T + b.
    """
    B = x_nchw.shape[0]
    x = x_nchw.reshape(B, IN_FEATURES)            # reshape only; no cast, no pad

    # Batch tile: whole (sublane-rounded) batch for tiny B; otherwise big tiles
    # for the HBM roofline, capped at 2048 rows and kept to >= 2 grid steps so
    # v7x's two TensorCores both get work.
    if B < 16:
        TM = max(8, _round_up(B, 8))
    else:
        TM = min(2048, _round_up(pl.cdiv(B, 2), 8))
    grid = (pl.cdiv(B, TM),)

    b1_2d = b1.reshape(1, HIDDEN)
    b2_2d = b2.reshape(1, OUT_FEATURES)

    cost = pl.CostEstimate(
        flops=2 * B * (IN_FEATURES * HIDDEN + HIDDEN * OUT_FEATURES),
        transcendentals=0,
        bytes_accessed=(B * IN_FEATURES * 4
                        + (IN_FEATURES * HIDDEN + HIDDEN
                           + HIDDEN * OUT_FEATURES + OUT_FEATURES) * 4
                        + B * OUT_FEATURES * 4),
    )

    # TODO(synk): for a tiny-batch serving loop, keep the weights VMEM-resident
    # across calls (cross-call prefetch / semaphore-future pattern) instead of
    # re-DMAing ~0.8 MiB of weights per call.
    out = pl.pallas_call(
        mlp_kernel,
        out_shape=jax.ShapeDtypeStruct((B, OUT_FEATURES), jnp.float32),
        grid=grid,
        in_specs=[
            pl.BlockSpec((TM, IN_FEATURES), lambda i: (i, 0)),       # x: tiled over B
            pl.BlockSpec((IN_FEATURES, HIDDEN), lambda i: (0, 0)),   # w1: resident
            pl.BlockSpec((1, HIDDEN), lambda i: (0, 0)),             # b1: resident
            pl.BlockSpec((HIDDEN, OUT_FEATURES), lambda i: (0, 0)),  # w2: resident
            pl.BlockSpec((1, OUT_FEATURES), lambda i: (0, 0)),       # b2: resident
        ],
        out_specs=pl.BlockSpec((TM, OUT_FEATURES), lambda i: (i, 0)),
        compiler_params=pltpu.CompilerParams(
            dimension_semantics=("parallel",),
        ),
        cost_estimate=cost,
    )(x, w1, b1_2d, w2, b2_2d)

    return out


def init_params(key):
    """nn.Linear-shaped params stored transposed (in_features, out_features),
    PyTorch-style uniform(-1/sqrt(fan_in), 1/sqrt(fan_in))."""
    k1, k2, k3, k4 = jax.random.split(key, 4)
    lim1 = 1.0 / jnp.sqrt(784.0)
    lim2 = 1.0 / jnp.sqrt(256.0)
    w1 = jax.random.uniform(k1, (784, 256), jnp.float32, -lim1, lim1)
    b1 = jax.random.uniform(k2, (256,), jnp.float32, -lim1, lim1)
    w2 = jax.random.uniform(k3, (256, 10), jnp.float32, -lim2, lim2)
    b2 = jax.random.uniform(k4, (10,), jnp.float32, -lim2, lim2)
    return w1, b1, w2, b2


def reference(x, w1, b1, w2, b2):
    h = jnp.maximum(x.reshape(x.shape[0], -1) @ w1 + b1, 0.0)
    return h @ w2 + b2


if __name__ == "__main__":
    key = jax.random.PRNGKey(0)
    k_x, k_p = jax.random.split(key)
    w1, b1, w2, b2 = init_params(k_p)

    # Small case (single grid step).
    B = 2
    x = jax.random.normal(k_x, (B, 1, 28, 28), jnp.float32)  # NCHW like PyTorch
    out = jax.block_until_ready(net_forward(x, w1, b1, w2, b2))
    assert out.shape == (B, 10)
    ref = reference(x, w1, b1, w2, b2)
    assert jnp.allclose(out, ref, atol=5e-2, rtol=5e-2)

    # Ragged multi-step grid (TM=16, grid=2, partial last block -> masked store).
    B2 = 20
    x2 = jax.random.normal(k_x, (B2, 1, 28, 28), jnp.float32)
    out2 = jax.block_until_ready(net_forward(x2, w1, b1, w2, b2))
    assert out2.shape == (B2, 10)
    ref2 = reference(x2, w1, b1, w2, b2)
    assert jnp.allclose(out2, ref2, atol=5e-2, rtol=5e-2)

    print("KERNEL_OK")
</pallas_src>

<mosaic_0001>
module attributes {stable_mosaic.version = 11 : i64} {
  func.func @mlp_kernel(%arg0: i32, %arg1: memref<8x784xf32, #tpu.memory_space<vmem>>, %arg2: memref<784x256xf32, #tpu.memory_space<vmem>>, %arg3: memref<1x256xf32, #tpu.memory_space<vmem>>, %arg4: memref<256x10xf32, #tpu.memory_space<vmem>>, %arg5: memref<1x10xf32, #tpu.memory_space<vmem>>, %arg6: memref<8x10xf32, #tpu.memory_space<vmem>>) attributes {dimension_semantics = [#tpu.dimension_semantics<parallel>], iteration_bounds = array<i64: 1>, scalar_prefetch = 0 : i64, scratch_operands = 0 : i64, tpu.core_type = #tpu.core_type<tc>, window_params = [{transform_indices = @transform_0, window_bounds = array<i64: 8, 784>}, {pipeline_mode = #tpu.pipeline_mode<synchronous>, transform_indices = @transform_1, window_bounds = array<i64: 784, 256>}, {pipeline_mode = #tpu.pipeline_mode<synchronous>, transform_indices = @transform_2, window_bounds = array<i64: 1, 256>}, {pipeline_mode = #tpu.pipeline_mode<synchronous>, transform_indices = @transform_3, window_bounds = array<i64: 256, 10>}, {pipeline_mode = #tpu.pipeline_mode<synchronous>, transform_indices = @transform_4, window_bounds = array<i64: 1, 10>}, {transform_indices = @transform_5, window_bounds = array<i64: 8, 10>}]} {
    %c0 = arith.constant 0 : index
    %c0_0 = arith.constant 0 : index
    %0 = vector.load %arg1[%c0, %c0_0] : memref<8x784xf32, #tpu.memory_space<vmem>>, vector<8x784xf32>
    %1 = arith.truncf %0 : vector<8x784xf32> to vector<8x784xbf16>
    %c0_1 = arith.constant 0 : index
    %c0_2 = arith.constant 0 : index
    %2 = vector.load %arg2[%c0_1, %c0_2] : memref<784x256xf32, #tpu.memory_space<vmem>>, vector<784x256xf32>
    %3 = arith.truncf %2 : vector<784x256xf32> to vector<784x256xbf16>
    %cst = arith.constant dense<0.000000e+00> : vector<8x256xf32>
    %4 = tpu.matmul %1, %3, %cst {dimension_numbers = #tpu.dot_dimension_numbers<[1], [0], [0], [1], [0, 0, 1, 1], [], []>} : vector<8x784xbf16>, vector<784x256xbf16>, vector<8x256xf32> -> vector<8x256xf32>
    %c0_3 = arith.constant 0 : index
    %c0_4 = arith.constant 0 : index
    %5 = vector.load %arg3[%c0_3, %c0_4] : memref<1x256xf32, #tpu.memory_space<vmem>>, vector<1x256xf32>
    %6 = vector.broadcast %5 : vector<1x256xf32> to vector<8x256xf32>
    %7 = arith.addf %4, %6 : vector<8x256xf32>
    %cst_5 = arith.constant 0.000000e+00 : f32
    %8 = vector.broadcast %cst_5 : f32 to vector<8x256xf32>
    %9 = arith.maximumf %7, %8 : vector<8x256xf32>
    %c0_6 = arith.constant 0 : index
    %c0_7 = arith.constant 0 : index
    %10 = vector.load %arg4[%c0_6, %c0_7] : memref<256x10xf32, #tpu.memory_space<vmem>>, vector<256x10xf32>
    %11 = arith.truncf %10 : vector<256x10xf32> to vector<256x10xbf16>
    %12 = arith.truncf %9 : vector<8x256xf32> to vector<8x256xbf16>
    %cst_8 = arith.constant dense<0.000000e+00> : vector<8x10xf32>
    %13 = tpu.matmul %12, %11, %cst_8 {dimension_numbers = #tpu.dot_dimension_numbers<[1], [0], [0], [1], [0, 0, 1, 1], [], []>} : vector<8x256xbf16>, vector<256x10xbf16>, vector<8x10xf32> -> vector<8x10xf32>
    %c0_9 = arith.constant 0 : index
    %c0_10 = arith.constant 0 : index
    %14 = vector.load %arg5[%c0_9, %c0_10] : memref<1x10xf32, #tpu.memory_space<vmem>>, vector<1x10xf32>
    %15 = vector.broadcast %14 : vector<1x10xf32> to vector<8x10xf32>
    %16 = arith.addf %13, %15 : vector<8x10xf32>
    %c0_11 = arith.constant 0 : index
    %c0_12 = arith.constant 0 : index
    %17 = vector.load %arg6[%c0_11, %c0_12] : memref<8x10xf32, #tpu.memory_space<vmem>>, vector<8x10xf32>
    tpu.vector_store %arg6[%c0_11, %c0_12], %16 {strides = array<i32>} : memref<8x10xf32, #tpu.memory_space<vmem>>, vector<8x10xf32>,
    return
  }
  func.func @transform_0(%arg0: i32) -> (i32, i32) {
    %c0_i32 = arith.constant 0 : i32
    %c0_i32_0 = arith.constant 0 : i32
    return %arg0, %c0_i32 : i32, i32
  }
  func.func @transform_1(%arg0: i32) -> (i32, i32) {
    %c0_i32 = arith.constant 0 : i32
    %c0_i32_0 = arith.constant 0 : i32
    %c0_i32_1 = arith.constant 0 : i32
    return %c0_i32, %c0_i32_0 : i32, i32
  }
  func.func @transform_2(%arg0: i32) -> (i32, i32) {
    %c0_i32 = arith.constant 0 : i32
    %c0_i32_0 = arith.constant 0 : i32
    %c0_i32_1 = arith.constant 0 : i32
    return %c0_i32, %c0_i32_0 : i32, i32
  }
  func.func @transform_3(%arg0: i32) -> (i32, i32) {
    %c0_i32 = arith.constant 0 : i32
    %c0_i32_0 = arith.constant 0 : i32
    %c0_i32_1 = arith.constant 0 : i32
    return %c0_i32, %c0_i32_0 : i32, i32
  }
  func.func @transform_4(%arg0: i32) -> (i32, i32) {
    %c0_i32 = arith.constant 0 : i32
    %c0_i32_0 = arith.constant 0 : i32
    %c0_i32_1 = arith.constant 0 : i32
    return %c0_i32, %c0_i32_0 : i32, i32
  }
  func.func @transform_5(%arg0: i32) -> (i32, i32) {
    %c0_i32 = arith.constant 0 : i32
    %c0_i32_0 = arith.constant 0 : i32
    return %arg0, %c0_i32 : i32, i32
  }
}

</mosaic_0001>

<llo_original>
// kernel: net_forward.1
$region0: #{net_forward.1}
  #allocation0 [shape = 'u32[]', space=smem, size = 0x4, offset = 0x4, fixed_abs, tag = 'smem constant byte address 0x4 - core index']
  #allocation1 [shape = 'u32[144,128]{1,0:T(1,128)}', space=vmem, size = 0x12000, scoped, tag = 'internal scratch']
  %s0 = inlined_call_operand.vmem [shape: f32[2,784], index: 0, kind: input, shape index: {}]
  %s1 = inlined_call_operand.hbm [shape: f32[784,256], index: 1, kind: input, shape index: {}]
  %s2 = inlined_call_operand.vmem [shape: f32[1,256], index: 2, kind: input, shape index: {}]
  %s3 = inlined_call_operand.vmem [shape: f32[256,10], index: 3, kind: input, shape index: {}]
  %s4 = inlined_call_operand.vmem [shape: f32[1,10], index: 4, kind: input, shape index: {}]
  %s5 = inlined_call_operand.hbm [shape: f32[2,10], index: 5, kind: output, shape index: {}]
  %s6 = sld [smem:[#allocation0]]
  $region34: #{net_forward.1} parent=0
    _
  %s8 = ssub.s32 1, %s6
  %s9 = scalar_select 0, %s8, %s6
  $region1: #{net_forward.1} parent=0
    #allocation2 [shape = 'u8[802816]{0}', space=vmem, size = 0xc4000, scoped, tag = 'input window, operand 1, single buffered']
    #allocation3 [shape = 's32[1]{0}', space=sflag, size = 0x4, scoped, tag = 'scoped memory for net_forward.1']
    #allocation4 [shape = 's32[1]{0}', space=sflag, size = 0x4, scoped, tag = 'scoped memory for net_forward.1']
    #allocation5 [shape = 'u8[4096]{0}', space=vmem, size = 0x1000, scoped, tag = 'output window, operand 0, single buffered']
    %10 = vsyncpa [#allocation3], 0
    %11 = vsyncpa [#allocation4], 0
    // Predicated region
    $region2: #{net_forward.1} parent=1 // pred_check
      _
    $region3: #{net_forward.1} parent=1 // pred_check_branch
      %13 = sbr.rel (0) target = $region5
    $region4: #{net_forward.1} parent=1 // pred_region
      _
    $region5: #{net_forward.1} parent=1 // pred_fallthru
      _
    // Predicated region
    $region6: #{net_forward.1} parent=1 // pred_check
      _
    $region7: #{net_forward.1} parent=1 // pred_check_branch
      %15 = sbr.rel (0) target = $region9
    $region8: #{net_forward.1} parent=1 // pred_region
      %s17 = ssub.s32 25088, 25088
      %18 = vsyncadd [#allocation3], %s17
      %s19 = sshll.u32 [#allocation2], 4
      %s20 = int_to_ptr.vmem [resolvable:$true] %s19
      %25 = dma.hbm_to_vmem [thread:$0]  %s1, 25088, %s20, [#allocation3], 256, 256, 16
    $region9: #{net_forward.1} parent=1 // pred_fallthru
      _
    // Predicated region
    $region10: #{net_forward.1} parent=1 // pred_check
      _
    $region11: #{net_forward.1} parent=1 // pred_check_branch
      %27 = sbr.rel (0) target = $region13
    $region12: #{net_forward.1} parent=1 // pred_region
      _
    $region13: #{net_forward.1} parent=1 // pred_fallthru
      _
    // Predicated region
    $region14: #{net_forward.1} parent=1 // pred_check
      _
    $region15: #{net_forward.1} parent=1 // pred_check_branch
      %29 = sbr.rel (0) target = $region17
    $region16: #{net_forward.1} parent=1 // pred_region
      _
    $region17: #{net_forward.1} parent=1 // pred_fallthru
      _
    // Predicated region
    $region18: #{net_forward.1} parent=1 // pred_check
      _
    $region19: #{net_forward.1} parent=1 // pred_check_branch
      %31 = sbr.rel (0) target = $region21
    $region20: #{net_forward.1} parent=1 // pred_region
      _
    $region21: #{net_forward.1} parent=1 // pred_fallthru
      _
    // Predicated region
    $region22: #{net_forward.1} parent=1 // pred_check
      _
    $region23: #{net_forward.1} parent=1 // pred_check_branch
      %33 = sbr.rel (0) target = $region25
    $region24: #{net_forward.1} parent=1 // pred_region
      %34 = dma.done [#allocation3], 25088
    $region25: #{net_forward.1} parent=1 // pred_fallthru
      _
    %v36 = vld [vmem:[%s0] sm:$0xff]
    %v37 = vld [vmem:[%s0 + $0x8] sm:$0x3f]
    %v38 = vld [vmem:[%s0 + $0xe] sm:$0xff]
    %v39 = vld [vmem:[%s0 + $0x16] sm:$0x3f]
    %v40 = vld [vmem:[%s0 + $0x1c] sm:$0xff]
    %v41 = vld [vmem:[%s0 + $0x24] sm:$0x3f]
    %v42 = vld [vmem:[%s0 + $0x2a] sm:$0xff]
    %v43 = vld [vmem:[%s0 + $0x32] sm:$0x3f]
    %v52 = vcombine.low %v36, %v38
    %v53 = vcombine.high %v36, %v38
    %v54 = vcombine.low %v40, %v42
    %v55 = vcombine.high %v40, %v42
    %v57 = vunpack.c.l.s4 1983009808
    %v58 = vunpack.c.0.s8 %v57
    %v59 = vlaneseq
    %v60 = vshrl.u32 %v59, 7
    %v61 = vsub.s32 %v58, %v60
    %v62 = vrot.slane %v52, %v61
    %v64 = vunpack.c.l.s4 1983009808
    %v65 = vunpack.c.0.s8 %v64
    %v66 = vlaneseq
    %v67 = vshrl.u32 %v66, 7
    %v68 = vsub.s32 %v65, %v67
    %v69 = vrot.slane %v53, %v68
    %v71 = vunpack.c.l.s4 1983009808
    %v72 = vunpack.c.0.s8 %v71
    %v73 = vlaneseq
    %v74 = vshrl.u32 %v73, 7
    %v75 = vsub.s32 %v72, %v74
    %v76 = vrot.slane %v54, %v75
    %v78 = vunpack.c.l.s4 1983009808
    %v79 = vunpack.c.0.s8 %v78
    %v80 = vlaneseq
    %v81 = vshrl.u32 %v80, 7
    %v82 = vsub.s32 %v79, %v81
    %v83 = vrot.slane %v55, %v82
    %v84 = vcombine.low %v62, %v76
    %v85 = vcombine.high %v62, %v76
    %v86 = vcombine.low %v69, %v83
    %v87 = vcombine.high %v69, %v83
    %v88 = vcombine.low %v37, %v39
    %v89 = vcombine.high %v37, %v39
    %v90 = vcombine.low %v41, %v43
    %v91 = vcombine.high %v41, %v43
    %v93 = vunpack.c.l.s4 1983009808
    %v94 = vunpack.c.0.s8 %v93
    %v95 = vlaneseq
    %v96 = vshrl.u32 %v95, 7
    %v97 = vsub.s32 %v94, %v96
    %v98 = vrot.slane %v88, %v97
    %v100 = vunpack.c.l.s4 1983009808
    %v101 = vunpack.c.0.s8 %v100
    %v102 = vlaneseq
    %v103 = vshrl.u32 %v102, 7
    %v104 = vsub.s32 %v101, %v103
    %v105 = vrot.slane %v89, %v104
    %v107 = vunpack.c.l.s4 1983009808
    %v108 = vunpack.c.0.s8 %v107
    %v109 = vlaneseq
    %v110 = vshrl.u32 %v109, 7
    %v111 = vsub.s32 %v108, %v110
    %v112 = vrot.slane %v90, %v111
    %v114 = vunpack.c.l.s4 1983009808
    %v115 = vunpack.c.0.s8 %v114
    %v116 = vlaneseq
    %v117 = vshrl.u32 %v116, 7
    %v118 = vsub.s32 %v115, %v117
    %v119 = vrot.slane %v91, %v118
    %v120 = vcombine.low %v98, %v112
    %v121 = vcombine.high %v98, %v112
    %v122 = vcombine.low %v105, %v119
    %v130 = vpack.c.bf16 %v84, %v84
    %v131 = vpack.c.bf16 %v85, %v85
    %v132 = vpack.c.bf16 %v86, %v86
    %v133 = vpack.c.bf16 %v87, %v87
    %v134 = vpack.c.bf16 %v120, %v120
    %v135 = vpack.c.bf16 %v121, %v121
    %v136 = vpack.c.bf16 %v122, %v122
    %v137 = vld [vmem:[#allocation2] sm:$0xff]
    %v138 = vld [vmem:[#allocation2 + $0x8] sm:$0xff]
    %v139 = vld [vmem:[#allocation2 + $0x10] sm:$0xff]
    %v140 = vld [vmem:[#allocation2 + $0x18] sm:$0xff]
    %v141 = vld [vmem:[#allocation2 + $0x20] sm:$0xff]
    %v142 = vld [vmem:[#allocation2 + $0x28] sm:$0xff]
    %v143 = vld [vmem:[#allocation2 + $0x30] sm:$0xff]
    %v144 = vld [vmem:[#allocation2 + $0x38] sm:$0xff]
    %v145 = vld [vmem:[#allocation2 + $0x40] sm:$0xff]
    %v146 = vld [vmem:[#allocation2 + $0x48] sm:$0xff]
    %v147 = vld [vmem:[#allocation2 + $0x50] sm:$0xff]
    %v148 = vld [vmem:[#allocation2 + $0x58] sm:$0xff]
    %v149 = vld [vmem:[#allocation2 + $0x60] sm:$0xff]
    %v150 = vld [vmem:[#allocation2 + $0x68] sm:$0xff]
    %v151 = vld [vmem:[#allocation2 + $0x70] sm:$0xff]
    %v152 = vld [vmem:[#allocation2 + $0x78] sm:$0xff]
    %v153 = vld [vmem:[#allocation2 + $0x80] sm:$0xff]
    %v154 = vld [vmem:[#allocation2 + $0x88] sm:$0xff]
    %v155 = vld [vmem:[#allocation2 + $0x90] sm:$0xff]
    %v156 = vld [vmem:[#allocation2 + $0x98] sm:$0xff]
    %v157 = vld [vmem:[#allocation2 + $0xa0] sm:$0xff]
    %v158 = vld [vmem:[#allocation2 + $0xa8] sm:$0xff]
    %v159 = vld [vmem:[#allocation2 + $0xb0] sm:$0xff]
    %v160 = vld [vmem:[#allocation2 + $0xb8] sm:$0xff]
    %v161 = vld [vmem:[#allocation2 + $0xc0] sm:$0xff]
    %v162 = vld [vmem:[#allocation2 + $0xc8] sm:$0xff]
    %v163 = vld [vmem:[#allocation2 + $0xd0] sm:$0xff]
    %v164 = vld [vmem:[#allocation2 + $0xd8] sm:$0xff]
    %v165 = vld [vmem:[#allocation2 + $0xe0] sm:$0xff]
    %v166 = vld [vmem:[#allocation2 + $0xe8] sm:$0xff]
    %v167 = vld [vmem:[#allocation2 + $0xf0] sm:$0xff]
    %v168 = vld [vmem:[#allocation2 + $0xf8] sm:$0xff]
    %v169 = vld [vmem:[#allocation2 + $0x100] sm:$0xff]
    %v170 = vld [vmem:[#allocation2 + $0x108] sm:$0xff]
    %v171 = vld [vmem:[#allocation2 + $0x110] sm:$0xff]
    %v172 = vld [vmem:[#allocation2 + $0x118] sm:$0xff]
    %v173 = vld [vmem:[#allocation2 + $0x120] sm:$0xff]
    %v174 = vld [vmem:[#allocation2 + $0x128] sm:$0xff]
    %v175 = vld [vmem:[#allocation2 + $0x130] sm:$0xff]
    %v176 = vld [vmem:[#allocation2 + $0x138] sm:$0xff]
    %v177 = vld [vmem:[#allocation2 + $0x140] sm:$0xff]
    %v178 = vld [vmem:[#allocation2 + $0x148] sm:$0xff]
    %v179 = vld [vmem:[#allocation2 + $0x150] sm:$0xff]
    %v180 = vld [vmem:[#allocation2 + $0x158] sm:$0xff]
    %v181 = vld [vmem:[#allocation2 + $0x160] sm:$0xff]
    %v182 = vld [vmem:[#allocation2 + $0x168] sm:$0xff]
    %v183 = vld [vmem:[#allocation2 + $0x170] sm:$0xff]
    %v184 = vld [vmem:[#allocation2 + $0x178] sm:$0xff]
    %v185 = vld [vmem:[#allocation2 + $0x180] sm:$0xff]
    %v186 = vld [vmem:[#allocation2 + $0x188] sm:$0xff]
    %v187 = vld [vmem:[#allocation2 + $0x190] sm:$0xff]
    %v188 = vld [vmem:[#allocation2 + $0x198] sm:$0xff]
    %v189 = vld [vmem:[#allocation2 + $0x1a0] sm:$0xff]
    %v190 = vld [vmem:[#allocation2 + $0x1a8] sm:$0xff]
    %v191 = vld [vmem:[#allocation2 + $0x1b0] sm:$0xff]
    %v192 = vld [vmem:[#allocation2 + $0x1b8] sm:$0xff]
    %v193 = vld [vmem:[#allocation2 + $0x1c0] sm:$0xff]
    %v194 = vld [vmem:[#allocation2 + $0x1c8] sm:$0xff]
    %v195 = vld [vmem:[#allocation2 + $0x1d0] sm:$0xff]
    %v196 = vld [vmem:[#allocation2 + $0x1d8] sm:$0xff]
    %v197 = vld [vmem:[#allocation2 + $0x1e0] sm:$0xff]
    %v198 = vld [vmem:[#allocation2 + $0x1e8] sm:$0xff]
    %v199 = vld [vmem:[#allocation2 + $0x1f0] sm:$0xff]
    %v200 = vld [vmem:[#allocation2 + $0x1f8] sm:$0xff]
    %v201 = vld [vmem:[#allocation2 + $0x200] sm:$0xff]
    %v202 = vld [vmem:[#allocation2 + $0x208] sm:$0xff]
    %v203 = vld [vmem:[#allocation2 + $0x210] sm:$0xff]
    %v204 = vld [vmem:[#allocation2 + $0x218] sm:$0xff]
    %v205 = vld [vmem:[#allocation2 + $0x220] sm:$0xff]
    %v206 = vld [vmem:[#allocation2 + $0x228] sm:$0xff]
    %v207 = vld [vmem:[#allocation2 + $0x230] sm:$0xff]
    %v208 = vld [vmem:[#allocation2 + $0x238] sm:$0xff]
    %v209 = vld [vmem:[#allocation2 + $0x240] sm:$0xff]
    %v210 = vld [vmem:[#allocation2 + $0x248] sm:$0xff]
    %v211 = vld [vmem:[#allocation2 + $0x250] sm:$0xff]
    %v212 = vld [vmem:[#allocation2 + $0x258] sm:$0xff]
    %v213 = vld [vmem:[#allocation2 + $0x260] sm:$0xff]
    %v214 = vld [vmem:[#allocation2 + $0x268] sm:$0xff]
    %v215 = vld [vmem:[#allocation2 + $0x270] sm:$0xff]
    %v216 = vld [vmem:[#allocation2 + $0x278] sm:$0xff]
    %v217 = vld [vmem:[#allocation2 + $0x280] sm:$0xff]
    %v218 = vld [vmem:[#allocation2 + $0x288] sm:$0xff]
    %v219 = vld [vmem:[#allocation2 + $0x290] sm:$0xff]
    %v220 = vld [vmem:[#allocation2 + $0x298] sm:$0xff]
    %v221 = vld [vmem:[#allocation2 + $0x2a0] sm:$0xff]
    %v222 = vld [vmem:[#allocation2 + $0x2a8] sm:$0xff]
    %v223 = vld [vmem:[#allocation2 + $0x2b0] sm:$0xff]
    %v224 = vld [vmem:[#allocation2 + $0x2b8] sm:$0xff]
    %v225 = vld [vmem:[#allocation2 + $0x2c0] sm:$0xff]
    %v226 = vld [vmem:[#allocation2 + $0x2c8] sm:$0xff]
    %v227 = vld [vmem:[#allocation2 + $0x2d0] sm:$0xff]
    %v228 = vld [vmem:[#allocation2 + $0x2d8] sm:$0xff]
    %v229 = vld [vmem:[#allocation2 + $0x2e0] sm:$0xff]
    %v230 = vld [vmem:[#allocation2 + $0x2e8] sm:$0xff]
    %v231 = vld [vmem:[#allocation2 + $0x2f0] sm:$0xff]
    %v232 = vld [vmem:[#allocation2 + $0x2f8] sm:$0xff]
    %v233 = vld [vmem:[#allocation2 + $0x300] sm:$0xff]
    %v234 = vld [vmem:[#allocation2 + $0x308] sm:$0xff]
    %v235 = vld [vmem:[#allocation2 + $0x310] sm:$0xff]
    %v236 = vld [vmem:[#allocation2 + $0x318] sm:$0xff]
    %v237 = vld [vmem:[#allocation2 + $0x320] sm:$0xff]
    %v238 = vld [vmem:[#allocation2 + $0x328] sm:$0xff]
    %v239 = vld [vmem:[#allocation2 + $0x330] sm:$0xff]
    %v240 = vld [vmem:[#allocation2 + $0x338] sm:$0xff]
    %v241 = vld [vmem:[#allocation2 + $0x340] sm:$0xff]
    %v242 = vld [vmem:[#allocation2 + $0x348] sm:$0xff]
    %v243 = vld [vmem:[#allocation2 + $0x350] sm:$0xff]
    %v244 = vld [vmem:[#allocation2 + $0x358] sm:$0xff]
    %v245 = vld [vmem:[#allocation2 + $0x360] sm:$0xff]
    %v246 = vld [vmem:[#allocation2 + $0x368] sm:$0xff]
    %v247 = vld [vmem:[#allocation2 + $0x370] sm:$0xff]
    %v248 = vld [vmem:[#allocation2 + $0x378] sm:$0xff]
    %v249 = vld [vmem:[#allocation2 + $0x380] sm:$0xff]
    %v250 = vld [vmem:[#allocation2 + $0x388] sm:$0xff]
    %v251 = vld [vmem:[#allocation2 + $0x390] sm:$0xff]
    %v252 = vld [vmem:[#allocation2 + $0x398] sm:$0xff]
    %v253 = vld [vmem:[#allocation2 + $0x3a0] sm:$0xff]
    %v254 = vld [vmem:[#allocation2 + $0x3a8] sm:$0xff]
    %v255 = vld [vmem:[#allocation2 + $0x3b0] sm:$0xff]
    %v256 = vld [vmem:[#allocation2 + $0x3b8] sm:$0xff]
    %v257 = vld [vmem:[#allocation2 + $0x3c0] sm:$0xff]
    %v258 = vld [vmem:[#allocation2 + $0x3c8] sm:$0xff]
    %v259 = vld [vmem:[#allocation2 + $0x3d0] sm:$0xff]
    %v260 = vld [vmem:[#allocation2 + $0x3d8] sm:$0xff]
    %v261 = vld [vmem:[#allocation2 + $0x3e0] sm:$0xff]
    %v262 = vld [vmem:[#allocation2 + $0x3e8] sm:$0xff]
    %v263 = vld [vmem:[#allocation2 + $0x3f0] sm:$0xff]
    %v264 = vld [vmem:[#allocation2 + $0x3f8] sm:$0xff]
    %v265 = vld [vmem:[#allocation2 + $0x400] sm:$0xff]
    %v266 = vld [vmem:[#allocation2 + $0x408] sm:$0xff]
    %v267 = vld [vmem:[#allocation2 + $0x410] sm:$0xff]
    %v268 = vld [vmem:[#allocation2 + $0x418] sm:$0xff]
    %v269 = vld [vmem:[#allocation2 + $0x420] sm:$0xff]
    %v270 = vld [vmem:[#allocation2 + $0x428] sm:$0xff]
    %v271 = vld [vmem:[#allocation2 + $0x430] sm:$0xff]
    %v272 = vld [vmem:[#allocation2 + $0x438] sm:$0xff]
    %v273 = vld [vmem:[#allocation2 + $0x440] sm:$0xff]
    %v274 = vld [vmem:[#allocation2 + $0x448] sm:$0xff]
    %v275 = vld [vmem:[#allocation2 + $0x450] sm:$0xff]
    %v276 = vld [vmem:[#allocation2 + $0x458] sm:$0xff]
    %v277 = vld [vmem:[#allocation2 + $0x460] sm:$0xff]
    %v278 = vld [vmem:[#allocation2 + $0x468] sm:$0xff]
    %v279 = vld [vmem:[#allocation2 + $0x470] sm:$0xff]
    %v280 = vld [vmem:[#allocation2 + $0x478] sm:$0xff]
    %v281 = vld [vmem:[#allocation2 + $0x480] sm:$0xff]
    %v282 = vld [vmem:[#allocation2 + $0x488] sm:$0xff]
    %v283 = vld [vmem:[#allocation2 + $0x490] sm:$0xff]
    %v284 = vld [vmem:[#allocation2 + $0x498] sm:$0xff]
    %v285 = vld [vmem:[#allocation2 + $0x4a0] sm:$0xff]
    %v286 = vld [vmem:[#allocation2 + $0x4a8] sm:$0xff]
    %v287 = vld [vmem:[#allocation2 + $0x4b0] sm:$0xff]
    %v288 = vld [vmem:[#allocation2 + $0x4b8] sm:$0xff]
    %v289 = vld [vmem:[#allocation2 + $0x4c0] sm:$0xff]
    %v290 = vld [vmem:[#allocation2 + $0x4c8] sm:$0xff]
    %v291 = vld [vmem:[#allocation2 + $0x4d0] sm:$0xff]
    %v292 = vld [vmem:[#allocation2 + $0x4d8] sm:$0xff]
    %v293 = vld [vmem:[#allocation2 + $0x4e0] sm:$0xff]
    %v294 = vld [vmem:[#allocation2 + $0x4e8] sm:$0xff]
    %v295 = vld [vmem:[#allocation2 + $0x4f0] sm:$0xff]
    %v296 = vld [vmem:[#allocation2 + $0x4f8] sm:$0xff]
    %v297 = vld [vmem:[#allocation2 + $0x500] sm:$0xff]
    %v298 = vld [vmem:[#allocation2 + $0x508] sm:$0xff]
    %v299 = vld [vmem:[#allocation2 + $0x510] sm:$0xff]
    %v300 = vld [vmem:[#allocation2 + $0x518] sm:$0xff]
    %v301 = vld [vmem:[#allocation2 + $0x520] sm:$0xff]
    %v302 = vld [vmem:[#allocation2 + $0x528] sm:$0xff]
    %v303 = vld [vmem:[#allocation2 + $0x530] sm:$0xff]
    %v304 = vld [vmem:[#allocation2 + $0x538] sm:$0xff]
    %v305 = vld [vmem:[#allocation2 + $0x540] sm:$0xff]
    %v306 = vld [vmem:[#allocation2 + $0x548] sm:$0xff]
    %v307 = vld [vmem:[#allocation2 + $0x550] sm:$0xff]
    %v308 = vld [vmem:[#allocation2 + $0x558] sm:$0xff]
    %v309 = vld [vmem:[#allocation2 + $0x560] sm:$0xff]
    %v310 = vld [vmem:[#allocation2 + $0x568] sm:$0xff]
    %v311 = vld [vmem:[#allocation2 + $0x570] sm:$0xff]
    %v312 = vld [vmem:[#allocation2 + $0x578] sm:$0xff]
    %v313 = vld [vmem:[#allocation2 + $0x580] sm:$0xff]
    %v314 = vld [vmem:[#allocation2 + $0x588] sm:$0xff]
    %v315 = vld [vmem:[#allocation2 + $0x590] sm:$0xff]
    %v316 = vld [vmem:[#allocation2 + $0x598] sm:$0xff]
    %v317 = vld [vmem:[#allocation2 + $0x5a0] sm:$0xff]
    %v318 = vld [vmem:[#allocation2 + $0x5a8] sm:$0xff]
    %v319 = vld [vmem:[#allocation2 + $0x5b0] sm:$0xff]
    %v320 = vld [vmem:[#allocation2 + $0x5b8] sm:$0xff]
    %v321 = vld [vmem:[#allocation2 + $0x5c0] sm:$0xff]
    %v322 = vld [vmem:[#allocation2 + $0x5c8] sm:$0xff]
    %v323 = vld [vmem:[#allocation2 + $0x5d0] sm:$0xff]
    %v324 = vld [vmem:[#allocation2 + $0x5d8] sm:$0xff]
    %v325 = vld [vmem:[#allocation2 + $0x5e0] sm:$0xff]
    %v326 = vld [vmem:[#allocation2 + $0x5e8] sm:$0xff]
    %v327 = vld [vmem:[#allocation2 + $0x5f0] sm:$0xff]
    %v328 = vld [vmem:[#allocation2 + $0x5f8] sm:$0xff]
    %v329 = vld [vmem:[#allocation2 + $0x600] sm:$0xff]
    %v330 = vld [vmem:[#allocation2 + $0x608] sm:$0xff]
    %v331 = vld [vmem:[#allocation2 + $0x610] sm:$0xff]
    %v332 = vld [vmem:[#allocation2 + $0x618] sm:$0xff]
    %v333 = vpack.c.bf16 %v139, %v137
    %v334 = vpack.c.bf16 %v140, %v138
    %v335 = vpack.c.bf16 %v143, %v141
    %v336 = vpack.c.bf16 %v144, %v142
    %v337 = vpack.c.bf16 %v147, %v145
    %v338 = vpack.c.bf16 %v148, %v146
    %v339 = vpack.c.bf16 %v151, %v149
    %v340 = vpack.c.bf16 %v152, %v150
    %v341 = vpack.c.bf16 %v155, %v153
    %v342 = vpack.c.bf16 %v156, %v154
    %v343 = vpack.c.bf16 %v159, %v157
    %v344 = vpack.c.bf16 %v160, %v158
    %v345 = vpack.c.bf16 %v163, %v161
    %v346 = vpack.c.bf16 %v164, %v162
    %v347 = vpack.c.bf16 %v167, %v165
    %v348 = vpack.c.bf16 %v168, %v166
    %v349 = vpack.c.bf16 %v171, %v169
    %v350 = vpack.c.bf16 %v172, %v170
    %v351 = vpack.c.bf16 %v175, %v173
    %v352 = vpack.c.bf16 %v176, %v174
    %v353 = vpack.c.bf16 %v179, %v177
    %v354 = vpack.c.bf16 %v180, %v178
    %v355 = vpack.c.bf16 %v183, %v181
    %v356 = vpack.c.bf16 %v184, %v182
    %v357 = vpack.c.bf16 %v187, %v185
    %v358 = vpack.c.bf16 %v188, %v186
    %v359 = vpack.c.bf16 %v191, %v189
    %v360 = vpack.c.bf16 %v192, %v190
    %v361 = vpack.c.bf16 %v195, %v193
    %v362 = vpack.c.bf16 %v196, %v194
    %v363 = vpack.c.bf16 %v199, %v197
    %v364 = vpack.c.bf16 %v200, %v198
    %v365 = vpack.c.bf16 %v203, %v201
    %v366 = vpack.c.bf16 %v204, %v202
    %v367 = vpack.c.bf16 %v207, %v205
    %v368 = vpack.c.bf16 %v208, %v206
    %v369 = vpack.c.bf16 %v211, %v209
    %v370 = vpack.c.bf16 %v212, %v210
    %v371 = vpack.c.bf16 %v215, %v213
    %v372 = vpack.c.bf16 %v216, %v214
    %v373 = vpack.c.bf16 %v219, %v217
    %v374 = vpack.c.bf16 %v220, %v218
    %v375 = vpack.c.bf16 %v223, %v221
    %v376 = vpack.c.bf16 %v224, %v222
    %v377 = vpack.c.bf16 %v227, %v225
    %v378 = vpack.c.bf16 %v228, %v226
    %v379 = vpack.c.bf16 %v231, %v229
    %v380 = vpack.c.bf16 %v232, %v230
    %v381 = vpack.c.bf16 %v235, %v233
    %v382 = vpack.c.bf16 %v236, %v234
    %v383 = vpack.c.bf16 %v239, %v237
    %v384 = vpack.c.bf16 %v240, %v238
    %v385 = vpack.c.bf16 %v243, %v241
    %v386 = vpack.c.bf16 %v244, %v242
    %v387 = vpack.c.bf16 %v247, %v245
    %v388 = vpack.c.bf16 %v248, %v246
    %v389 = vpack.c.bf16 %v251, %v249
    %v390 = vpack.c.bf16 %v252, %v250
    %v391 = vpack.c.bf16 %v255, %v253
    %v392 = vpack.c.bf16 %v256, %v254
    %v393 = vpack.c.bf16 %v259, %v257
    %v394 = vpack.c.bf16 %v260, %v258
    %v395 = vpack.c.bf16 %v263, %v261
    %v396 = vpack.c.bf16 %v264, %v262
    %v397 = vpack.c.bf16 %v267, %v265
    %v398 = vpack.c.bf16 %v268, %v266
    %v399 = vpack.c.bf16 %v271, %v269
    %v400 = vpack.c.bf16 %v272, %v270
    %v401 = vpack.c.bf16 %v275, %v273
    %v402 = vpack.c.bf16 %v276, %v274
    %v403 = vpack.c.bf16 %v279, %v277
    %v404 = vpack.c.bf16 %v280, %v278
    %v405 = vpack.c.bf16 %v283, %v281
    %v406 = vpack.c.bf16 %v284, %v282
    %v407 = vpack.c.bf16 %v287, %v285
    %v408 = vpack.c.bf16 %v288, %v286
    %v409 = vpack.c.bf16 %v291, %v289
    %v410 = vpack.c.bf16 %v292, %v290
    %v411 = vpack.c.bf16 %v295, %v293
    %v412 = vpack.c.bf16 %v296, %v294
    %v413 = vpack.c.bf16 %v299, %v297
    %v414 = vpack.c.bf16 %v300, %v298
    %v415 = vpack.c.bf16 %v303, %v301
    %v416 = vpack.c.bf16 %v304, %v302
    %v417 = vpack.c.bf16 %v307, %v305
    %v418 = vpack.c.bf16 %v308, %v306
    %v419 = vpack.c.bf16 %v311, %v309
    %v420 = vpack.c.bf16 %v312, %v310
    %v421 = vpack.c.bf16 %v315, %v313
    %v422 = vpack.c.bf16 %v316, %v314
    %v423 = vpack.c.bf16 %v319, %v317
    %v424 = vpack.c.bf16 %v320, %v318
    %v425 = vpack.c.bf16 %v323, %v321
    %v426 = vpack.c.bf16 %v324, %v322
    %v427 = vpack.c.bf16 %v327, %v325
    %v428 = vpack.c.bf16 %v328, %v326
    %v429 = vpack.c.bf16 %v331, %v329
    %v430 = vpack.c.bf16 %v332, %v330
    %v431 = vld [vmem:[%s2] sm:$0x3]
    %v433 = vlaneseq
    %v434 = vshrl.u32 %v433, 7
    %v435 = vsub.s32 0, %v434
    %v436 = vrot.slane %v431, %v435
    %v437 = vlaneseq
    %v438 = vshrl.u32 %v437, 7
    %v439 = vsub.s32 1, %v438
    %v440 = vrot.slane %v431, %v439
    %vm443 = vcmask 130048
    %v445 = vsel %vm443, %v136, 0
    %447 = vmatprep.subr.bf16.mxu0 %v348
    %448 = vmatpush1.bf16.msra.mxu0 %v347
    %449 = vmatprep.subr.bf16.mxu0 %v346
    %450 = vmatpush1.bf16.msra.mxu0 %v345
    %451 = vmatprep.subr.bf16.mxu0 %v344
    %452 = vmatpush1.bf16.msra.mxu0 %v343
    %453 = vmatprep.subr.bf16.mxu0 %v342
    %454 = vmatpush1.bf16.msra.mxu0 %v341
    %455 = vmatprep.subr.bf16.mxu0 %v340
    %456 = vmatpush1.bf16.msra.mxu0 %v339
    %457 = vmatprep.subr.bf16.mxu0 %v338
    %458 = vmatpush1.bf16.msra.mxu0 %v337
    %459 = vmatprep.subr.bf16.mxu0 %v336
    %460 = vmatpush1.bf16.msra.mxu0 %v335
    %461 = vmatprep.subr.bf16.mxu0 %v334
    %462 = vmatpush1.bf16.msra.mxu0 %v333
    %463 = vmatprep.subr.bf16.mxu0 %v364
    %464 = vmatpush2.bf16.msra.mxu0 %v363
    %465 = vmatprep.subr.bf16.mxu0 %v362
    %466 = vmatpush2.bf16.msra.mxu0 %v361
    %467 = vmatprep.subr.bf16.mxu0 %v360
    %468 = vmatpush2.bf16.msra.mxu0 %v359
    %469 = vmatprep.subr.bf16.mxu0 %v358
    %470 = vmatpush2.bf16.msra.mxu0 %v357
    %471 = vmatprep.subr.bf16.mxu0 %v356
    %472 = vmatpush2.bf16.msra.mxu0 %v355
    %473 = vmatprep.subr.bf16.mxu0 %v354
    %474 = vmatpush2.bf16.msra.mxu0 %v353
    %475 = vmatprep.subr.bf16.mxu0 %v352
    %476 = vmatpush2.bf16.msra.mxu0 %v351
    %477 = vmatprep.subr.bf16.mxu0 %v350
    %478 = vmatpush2.bf16.msra.mxu0 %v349
    %479 = vmatprep.mubr.bf16.mxu0 %v131
    %480 = vmatmul.mubr.bf16.gmra.mxu0 %v130
    %v481 = vpop.f32.mrf.mxu0
    %v482 = vadd.f32 %v436, %v481
    %v483 = vpop.f32.mrf.mxu0
    %v484 = vadd.f32 %v440, %v483
    %v485 = vpop.f32.mrf.mxu0
    %v486 = vpop.f32.mrf.mxu0
    %487 = vdwg.mxu0
    %488 = vmatprep.subr.bf16.mxu0 %v380
    %489 = vmatpush1.bf16.msra.mxu0 %v379
    %490 = vmatprep.subr.bf16.mxu0 %v378
    %491 = vmatpush1.bf16.msra.mxu0 %v377
    %492 = vmatprep.subr.bf16.mxu0 %v376
    %493 = vmatpush1.bf16.msra.mxu0 %v375
    %494 = vmatprep.subr.bf16.mxu0 %v374
    %495 = vmatpush1.bf16.msra.mxu0 %v373
    %496 = vmatprep.subr.bf16.mxu0 %v372
    %497 = vmatpush1.bf16.msra.mxu0 %v371
    %498 = vmatprep.subr.bf16.mxu0 %v370
    %499 = vmatpush1.bf16.msra.mxu0 %v369
    %500 = vmatprep.subr.bf16.mxu0 %v368
    %501 = vmatpush1.bf16.msra.mxu0 %v367
    %502 = vmatprep.subr.bf16.mxu0 %v366
    %503 = vmatpush1.bf16.msra.mxu0 %v365
    %504 = vmatprep.subr.bf16.mxu0 %v396
    %505 = vmatpush2.bf16.msra.mxu0 %v395
    %506 = vmatprep.subr.bf16.mxu0 %v394
    %507 = vmatpush2.bf16.msra.mxu0 %v393
    %508 = vmatprep.subr.bf16.mxu0 %v392
    %509 = vmatpush2.bf16.msra.mxu0 %v391
    %510 = vmatprep.subr.bf16.mxu0 %v390
    %511 = vmatpush2.bf16.msra.mxu0 %v389
    %512 = vmatprep.subr.bf16.mxu0 %v388
    %513 = vmatpush2.bf16.msra.mxu0 %v387
    %514 = vmatprep.subr.bf16.mxu0 %v386
    %515 = vmatpush2.bf16.msra.mxu0 %v385
    %516 = vmatprep.subr.bf16.mxu0 %v384
    %517 = vmatpush2.bf16.msra.mxu0 %v383
    %518 = vmatprep.subr.bf16.mxu0 %v382
    %519 = vmatpush2.bf16.msra.mxu0 %v381
    %520 = vmatprep.mubr.bf16.mxu0 %v133
    %521 = vmatmul.mubr.bf16.gmra.mxu0 %v132
    %v522 = vpop.f32.mrf.mxu0
    %v523 = vadd.f32 %v482, %v522
    %v524 = vpop.f32.mrf.mxu0
    %v525 = vadd.f32 %v484, %v524
    %v526 = vpop.f32.mrf.mxu0
    %v527 = vpop.f32.mrf.mxu0
    %528 = vdwg.mxu0
    %529 = vmatprep.subr.bf16.mxu0 %v412
    %530 = vmatpush1.bf16.msra.mxu0 %v411
    %531 = vmatprep.subr.bf16.mxu0 %v410
    %532 = vmatpush1.bf16.msra.mxu0 %v409
    %533 = vmatprep.subr.bf16.mxu0 %v408
    %534 = vmatpush1.bf16.msra.mxu0 %v407
    %535 = vmatprep.subr.bf16.mxu0 %v406
    %536 = vmatpush1.bf16.msra.mxu0 %v405
    %537 = vmatprep.subr.bf16.mxu0 %v404
    %538 = vmatpush1.bf16.msra.mxu0 %v403
    %539 = vmatprep.subr.bf16.mxu0 %v402
    %540 = vmatpush1.bf16.msra.mxu0 %v401
    %541 = vmatprep.subr.bf16.mxu0 %v400
    %542 = vmatpush1.bf16.msra.mxu0 %v399
    %543 = vmatprep.subr.bf16.mxu0 %v398
    %544 = vmatpush1.bf16.msra.mxu0 %v397
    %545 = vmatprep.subr.bf16.mxu0 %v428
    %546 = vmatpush2.bf16.msra.mxu0 %v427
    %547 = vmatprep.subr.bf16.mxu0 %v426
    %548 = vmatpush2.bf16.msra.mxu0 %v425
    %549 = vmatprep.subr.bf16.mxu0 %v424
    %550 = vmatpush2.bf16.msra.mxu0 %v423
    %551 = vmatprep.subr.bf16.mxu0 %v422
    %552 = vmatpush2.bf16.msra.mxu0 %v421
    %553 = vmatprep.subr.bf16.mxu0 %v420
    %554 = vmatpush2.bf16.msra.mxu0 %v419
    %555 = vmatprep.subr.bf16.mxu0 %v418
    %556 = vmatpush2.bf16.msra.mxu0 %v417
    %557 = vmatprep.subr.bf16.mxu0 %v416
    %558 = vmatpush2.bf16.msra.mxu0 %v415
    %559 = vmatprep.subr.bf16.mxu0 %v414
    %560 = vmatpush2.bf16.msra.mxu0 %v413
    %561 = vmatprep.mubr.bf16.mxu0 %v135
    %562 = vmatmul.mubr.bf16.gmra.mxu0 %v134
    %v563 = vpop.f32.mrf.mxu0
    %v564 = vadd.f32 %v523, %v563
    %v565 = vpop.f32.mrf.mxu0
    %v566 = vadd.f32 %v525, %v565
    %v567 = vpop.f32.mrf.mxu0
    %v568 = vpop.f32.mrf.mxu0
    %569 = vdwg.mxu0
    %570 = vmatprep.subr.bf16.mxu0 0
    %571 = vmatpush1.bf16.msra.mxu0 0
    %572 = vmatprep.subr.bf16.mxu0 0
    %573 = vmatpush1.bf16.msra.mxu0 0
    %574 = vmatprep.subr.bf16.mxu0 0
    %575 = vmatpush1.bf16.msra.mxu0 0
    %576 = vmatprep.subr.bf16.mxu0 0
    %577 = vmatpush1.bf16.msra.mxu0 0
    %578 = vmatprep.subr.bf16.mxu0 0
    %579 = vmatpush1.bf16.msra.mxu0 0
    %580 = vmatprep.subr.bf16.mxu0 0
    %581 = vmatpush1.bf16.msra.mxu0 0
    %582 = vmatprep.subr.bf16.mxu0 0
    %583 = vmatpush1.bf16.msra.mxu0 0
    %584 = vmatprep.subr.bf16.mxu0 %v430
    %585 = vmatpush1.bf16.msra.mxu0 %v429
    %586 = vmatprep.subr.bf16.mxu0 0
    %587 = vmatpush2.bf16.msra.mxu0 0
    %588 = vmatprep.subr.bf16.mxu0 0
    %589 = vmatpush2.bf16.msra.mxu0 0
    %590 = vmatprep.subr.bf16.mxu0 0
    %591 = vmatpush2.bf16.msra.mxu0 0
    %592 = vmatprep.subr.bf16.mxu0 0
    %593 = vmatpush2.bf16.msra.mxu0 0
    %594 = vmatprep.subr.bf16.mxu0 0
    %595 = vmatpush2.bf16.msra.mxu0 0
    %596 = vmatprep.subr.bf16.mxu0 0
    %597 = vmatpush2.bf16.msra.mxu0 0
    %598 = vmatprep.subr.bf16.mxu0 0
    %599 = vmatpush2.bf16.msra.mxu0 0
    %600 = vmatprep.subr.bf16.mxu0 0
    %601 = vmatpush2.bf16.msra.mxu0 0
    %602 = vmatprep.mubr.bf16.mxu0 0
    %603 = vmatmul.mubr.bf16.gmra.mxu0 %v445
    %v604 = vpop.f32.mrf.mxu0
    %v605 = vadd.f32 %v564, %v604
    %v606 = vpop.f32.mrf.mxu0
    %v607 = vadd.f32 %v566, %v606
    %v608 = vpop.f32.mrf.mxu0
    %v609 = vpop.f32.mrf.mxu0
    %610 = vdwg.mxu0
    %v611 = vmax.f32 %v605, 0.0
    %v612 = vmax.f32 %v607, 0.0
    %v613 = vld [vmem:[%s3] sm:$0xff]
    %v614 = vld [vmem:[%s3 + $0x8] sm:$0xff]
    %v615 = vld [vmem:[%s3 + $0x10] sm:$0xff]
    %v616 = vld [vmem:[%s3 + $0x18] sm:$0xff]
    %v617 = vld [vmem:[%s3 + $0x20] sm:$0xff]
    %v618 = vld [vmem:[%s3 + $0x28] sm:$0xff]
    %v619 = vld [vmem:[%s3 + $0x30] sm:$0xff]
    %v620 = vld [vmem:[%s3 + $0x38] sm:$0xff]
    %v621 = vld [vmem:[%s3 + $0x40] sm:$0xff]
    %v622 = vld [vmem:[%s3 + $0x48] sm:$0xff]
    %v623 = vld [vmem:[%s3 + $0x50] sm:$0xff]
    %v624 = vld [vmem:[%s3 + $0x58] sm:$0xff]
    %v625 = vld [vmem:[%s3 + $0x60] sm:$0xff]
    %v626 = vld [vmem:[%s3 + $0x68] sm:$0xff]
    %v627 = vld [vmem:[%s3 + $0x70] sm:$0xff]
    %v628 = vld [vmem:[%s3 + $0x78] sm:$0xff]
    %v629 = vld [vmem:[%s3 + $0x80] sm:$0xff]
    %v630 = vld [vmem:[%s3 + $0x88] sm:$0xff]
    %v631 = vld [vmem:[%s3 + $0x90] sm:$0xff]
    %v632 = vld [vmem:[%s3 + $0x98] sm:$0xff]
    %v633 = vld [vmem:[%s3 + $0xa0] sm:$0xff]
    %v634 = vld [vmem:[%s3 + $0xa8] sm:$0xff]
    %v635 = vld [vmem:[%s3 + $0xb0] sm:$0xff]
    %v636 = vld [vmem:[%s3 + $0xb8] sm:$0xff]
    %v637 = vld [vmem:[%s3 + $0xc0] sm:$0xff]
    %v638 = vld [vmem:[%s3 + $0xc8] sm:$0xff]
    %v639 = vld [vmem:[%s3 + $0xd0] sm:$0xff]
    %v640 = vld [vmem:[%s3 + $0xd8] sm:$0xff]
    %v641 = vld [vmem:[%s3 + $0xe0] sm:$0xff]
    %v642 = vld [vmem:[%s3 + $0xe8] sm:$0xff]
    %v643 = vld [vmem:[%s3 + $0xf0] sm:$0xff]
    %v644 = vld [vmem:[%s3 + $0xf8] sm:$0xff]
    %v645 = vpack.c.bf16 %v614, %v613
    %v646 = vpack.c.bf16 %v616, %v615
    %v647 = vpack.c.bf16 %v618, %v617
    %v648 = vpack.c.bf16 %v620, %v619
    %v649 = vpack.c.bf16 %v622, %v621
    %v650 = vpack.c.bf16 %v624, %v623
    %v651 = vpack.c.bf16 %v626, %v625
    %v652 = vpack.c.bf16 %v628, %v627
    %v653 = vpack.c.bf16 %v630, %v629
    %v654 = vpack.c.bf16 %v632, %v631
    %v655 = vpack.c.bf16 %v634, %v633
    %v656 = vpack.c.bf16 %v636, %v635
    %v657 = vpack.c.bf16 %v638, %v637
    %v658 = vpack.c.bf16 %v640, %v639
    %v659 = vpack.c.bf16 %v642, %v641
    %v660 = vpack.c.bf16 %v644, %v643
    %v661 = vpack.c.bf16 %v611, %v611
    %v662 = vpack.c.bf16 %v612, %v612
    %v663 = vld [vmem:[%s4] sm:$0x1]
    %v665 = vlaneseq
    %v666 = vshrl.u32 %v665, 7
    %v667 = vsub.s32 0, %v666
    %v668 = vrot.slane %v663, %v667
    %670 = vmatprep.subr.bf16.mxu0 0
    %671 = vmatpush1.bf16.msra.mxu0 %v652
    %672 = vmatprep.subr.bf16.mxu0 0
    %673 = vmatpush1.bf16.msra.mxu0 %v651
    %674 = vmatprep.subr.bf16.mxu0 0
    %675 = vmatpush1.bf16.msra.mxu0 %v650
    %676 = vmatprep.subr.bf16.mxu0 0
    %677 = vmatpush1.bf16.msra.mxu0 %v649
    %678 = vmatprep.subr.bf16.mxu0 0
    %679 = vmatpush1.bf16.msra.mxu0 %v648
    %680 = vmatprep.subr.bf16.mxu0 0
    %681 = vmatpush1.bf16.msra.mxu0 %v647
    %682 = vmatprep.subr.bf16.mxu0 0
    %683 = vmatpush1.bf16.msra.mxu0 %v646
    %684 = vmatprep.subr.bf16.mxu0 0
    %685 = vmatpush1.bf16.msra.mxu0 %v645
    %686 = vmatprep.subr.bf16.mxu0 0
    %687 = vmatpush2.bf16.msra.mxu0 %v660
    %688 = vmatprep.subr.bf16.mxu0 0
    %689 = vmatpush2.bf16.msra.mxu0 %v659
    %690 = vmatprep.subr.bf16.mxu0 0
    %691 = vmatpush2.bf16.msra.mxu0 %v658
    %692 = vmatprep.subr.bf16.mxu0 0
    %693 = vmatpush2.bf16.msra.mxu0 %v657
    %694 = vmatprep.subr.bf16.mxu0 0
    %695 = vmatpush2.bf16.msra.mxu0 %v656
    %696 = vmatprep.subr.bf16.mxu0 0
    %697 = vmatpush2.bf16.msra.mxu0 %v655
    %698 = vmatprep.subr.bf16.mxu0 0
    %699 = vmatpush2.bf16.msra.mxu0 %v654
    %700 = vmatprep.subr.bf16.mxu0 0
    %701 = vmatpush2.bf16.msra.mxu0 %v653
    %702 = vmatprep.mubr.bf16.mxu0 %v662
    %703 = vmatmul.mubr.bf16.gmra.mxu0 %v661
    %v704 = vpop.f32.mrf.mxu0
    %v705 = vadd.f32 %v668, %v704
    %v706 = vpop.f32.mrf.mxu0
    %v707 = vpop.f32.mrf.mxu0
    %v708 = vpop.f32.mrf.mxu0
    %709 = vdwg.mxu0
    %vm710 = vcmask 80896
    %711 = vst.msk [vmem:[#allocation5] sm:$0xff] %vm710, %v705
    // Predicated region
    $region26: #{net_forward.1} parent=1 // pred_check
      _
    $region27: #{net_forward.1} parent=1 // pred_check_branch
      %713 = sbr.rel (0) target = $region29
    $region28: #{net_forward.1} parent=1 // pred_region
      %s715 = ssub.s32 128, 32
      %716 = vsyncadd [#allocation4], %s715
      %s717 = sshll.u32 [#allocation5], 4
      %s718 = int_to_ptr.vmem [resolvable:$true] %s717
      %723 = dma.vmem_to_hbm [thread:$0]  %s718, 32, %s5, [#allocation4], 32, 32, 2
    $region29: #{net_forward.1} parent=1 // pred_fallthru
      _
    // Predicated region
    $region30: #{net_forward.1} parent=1 // pred_check
      _
    $region31: #{net_forward.1} parent=1 // pred_check_branch
      %725 = sbr.rel (0) target = $region33
    $region32: #{net_forward.1} parent=1 // pred_region
      %726 = dma.done [#allocation4], 128
    $region33: #{net_forward.1} parent=1 // pred_fallthru
      _
    %727 = vsyncpa [#allocation3], 1
    %728 = vsyncpa [#allocation4], 1

</llo_original>
